<compile_context>
chip_gen: v6e
topology: v6e:2x2x1
jax: 0.10.0
libtpu: 0.0.40
codegen_flags: <defaults>
</compile_context>

<pallas_src>
import jax
import jax.numpy as jnp
from jax.experimental import pallas as pl
from jax.experimental.pallas import tpu as pltpu

_INV_SQRT2 = 0.7071067811865476


def _round_up(x, m):
    return ((x + m - 1) // m) * m


def _pick_batch_block(batch, max_block=256):
    """Batch rows handled per grid step.

    Constraints: batch % tb == 0 and (tb % 8 == 0 or tb == batch) so every
    tb-sized BlockSpec stays sublane-legal.  When alignment allows, keep >= 2
    batch blocks so dimension_semantics=("parallel", ...) can shard the batch
    axis across v7x's two TensorCores (neutral on single-TC v5e/v6e).
    max_block is kept moderate so per-step VMEM stays small on v5e/v7x.
    """
    if batch <= max_block:
        if batch % 16 == 0:
            return batch // 2          # two aligned blocks -> both v7x TCs busy
        return batch                   # tiny / odd batch: single block
    for tb in range(max_block, 7, -1):
        if batch % tb == 0 and tb % 8 == 0:
            return tb
    return batch                       # no aligned divisor: fall back to one block


# ----------------------------------------------------------------------------
# Fused kernel: chunked one-hot token gather (accumulated) + MLP start embed
# ----------------------------------------------------------------------------
def _fused_embed_kernel(ids_ref, x_ref, w1_ref, b1_ref, w2_ref, b2_ref,
                        tbl_ref, o_ref):
    """One grid step = `tb` batch rows x one (Vc, Hp) slice of the table.

    The output block is VMEM-resident across the vocab axis and acts as the
    accumulator; each token row receives its embedding from exactly one chunk
    (other chunks contribute zeros), sentinel ids (-1, the time-0 slot) never
    match any chunk so those rows stay zero until the start embed is stored.
    """
    v = pl.program_id(1)
    nv = pl.num_programs(1)
    tb = x_ref.shape[0]
    nblk = o_ref.shape[0]
    t1 = nblk // tb                       # tokens per sequence incl. start slot
    vc = tbl_ref.shape[0]

    # ---- token-embedding gather for this vocab chunk (bf16 MXU, f32 acc) ----
    local = ids_ref[...] - v * vc                          # (nblk, 1) int32
    lane = jax.lax.broadcasted_iota(jnp.int32, (1, vc), 1) # small iota, broadcast in compare
    onehot = (lane == local).astype(tbl_ref.dtype)         # (nblk, vc) 0/1 bf16
    emb = jnp.dot(onehot, tbl_ref[...],
                  preferred_element_type=jnp.float32)      # (nblk, Hp) f32

    @pl.when(v == 0)
    def _init():
        o_ref[...] = emb

    @pl.when(v > 0)
    def _accumulate():
        o_ref[...] += emb

    # ---- features_to_embed MLP + direct store of start embed at time 0 ----
    @pl.when(v == nv - 1)
    def _finish():
        x = x_ref[...].astype(jnp.bfloat16)
        h = jnp.dot(x, w1_ref[...], preferred_element_type=jnp.float32) + b1_ref[...]
        h = 0.5 * h * (1.0 + jax.lax.erf(h * _INV_SQRT2))  # exact (erf) GELU
        start = (jnp.dot(h.astype(jnp.bfloat16), w2_ref[...],
                         preferred_element_type=jnp.float32) + b2_ref[...])  # (tb, Hp)
        # Scatter `start` into rows 0, t1, 2*t1, ... : a handful of static
        # single-row sublane stores (replaces the old selection matmul).
        for b in range(tb):
            o_ref[b * t1:b * t1 + 1, :] = start[b:b + 1, :]


# ----------------------------------------------------------------------------
# Wrapper: _generate_embeddings_and_masks(..., input_is_tokens=True)
# ----------------------------------------------------------------------------
def generate_embeddings(previous_tokens, image_features, attitude, params):
    """Returns the (B, T+1, H) input embeddings, matching the PyTorch module."""
    B, T = previous_tokens.shape
    t1 = T + 1
    w1, b1, w2, b2 = params["w1"], params["b1"], params["w2"], params["b2"]
    table = params["embed_table"]
    H = params["hidden_size"]
    Vc = params["vocab_chunk"]
    Vp, Hp = table.shape
    Kp, H1p = w1.shape

    # Tiny host-side glue only (small int / feature tensors); the big output is
    # produced directly by the fused kernel.
    feats = jnp.concatenate([image_features, attitude], axis=1).astype(jnp.float32)
    feats_p = jnp.zeros((B, Kp), jnp.float32).at[:, :feats.shape[1]].set(feats)
    # NOTE: ids must lie in [0, V); out-of-range ids silently yield zero rows.
    ids_aug = jnp.concatenate(
        [jnp.full((B, 1), -1, jnp.int32), previous_tokens.astype(jnp.int32)], axis=1)
    ids_flat = ids_aug.reshape(B * t1, 1)                  # row layout of the output

    tb = _pick_batch_block(B)
    nblk = tb * t1
    nv = Vp // Vc

    # Scoped-VMEM budget from the actual per-step buffers (v5e default scoped
    # VMEM is only 16 MiB; an explicit limit keeps double buffering alive).
    vmem_bytes = (
        2 * (nblk * 4 + tb * Kp * 4 + Vc * Hp * 2 + nblk * Hp * 4)      # pipelined blocks
        + (Kp * H1p + H1p * Hp) * 2 + (H1p + Hp) * 4                    # resident weights
        + nblk * Vc * 6 + nblk * Hp * 4 + tb * (H1p + Hp) * 4)          # transients
    vmem_limit = int(min(max(2 * vmem_bytes, 16 << 20), 100 << 20))

    out = pl.pallas_call(
        _fused_embed_kernel,
        out_shape=jax.ShapeDtypeStruct((B * t1, Hp), jnp.float32),
        grid_spec=pltpu.PrefetchScalarGridSpec(
            num_scalar_prefetch=0,
            grid=(B // tb, nv),                            # vocab (reduction) axis last
            in_specs=[
                pl.BlockSpec((nblk, 1), lambda i, v: (i, 0)),    # token ids (flat)
                pl.BlockSpec((tb, Kp), lambda i, v: (i, 0)),     # padded features
                pl.BlockSpec(w1.shape, lambda i, v: (0, 0)),     # resident bf16 weights
                pl.BlockSpec(b1.shape, lambda i, v: (0, 0)),
                pl.BlockSpec(w2.shape, lambda i, v: (0, 0)),
                pl.BlockSpec(b2.shape, lambda i, v: (0, 0)),
                pl.BlockSpec((Vc, Hp), lambda i, v: (v, 0)),     # streamed table chunk
            ],
            out_specs=pl.BlockSpec((nblk, Hp), lambda i, v: (i, 0)),  # accumulator block
        ),
        compiler_params=pltpu.CompilerParams(
            dimension_semantics=("parallel", "arbitrary"),
            vmem_limit_bytes=vmem_limit),
    )(ids_flat, feats_p, w1, b1, w2, b2, table)

    out = out.reshape(B, t1, Hp)                           # free (row-major) reshape
    if Hp != H:
        out = out[:, :, :H]
    return out


# ----------------------------------------------------------------------------
# Parameter init (unpadded, "PyTorch" shapes) + MXU-friendly padding / bf16 cast
# ----------------------------------------------------------------------------
def init_params(key, feature_size, hidden_size, vocab_size):
    h1 = (feature_size + hidden_size + 1) // 2
    k1, k2, k3, k4, k5 = jax.random.split(key, 5)
    return {
        "w1": jax.random.normal(k1, (feature_size + 1, h1), jnp.float32) * 0.02,
        "b1": jax.random.normal(k2, (1, h1), jnp.float32) * 0.02,
        "w2": jax.random.normal(k3, (h1, hidden_size), jnp.float32) * 0.02,
        "b2": jax.random.normal(k4, (1, hidden_size), jnp.float32) * 0.02,
        "embed_table": jax.random.normal(k5, (vocab_size, hidden_size), jnp.float32) * 0.02,
    }


def prepare_params(raw, vocab_chunk=512):
    """Pad once (at init) to lane/MXU-aligned tiles and cast big operands to bf16.

    Padding is exact (padded rows/cols only ever meet zeros; padded vocab rows
    are never selected).  bf16 weights/table with f32 accumulation is the
    reduced-precision MXU path (~1e-4 abs error at these value scales) and
    halves the table's VMEM/DMA footprint.
    """
    w1, b1, w2, b2, table = (raw["w1"], raw["b1"], raw["w2"], raw["b2"],
                             raw["embed_table"])
    K, H1 = w1.shape
    H = w2.shape[1]
    V = table.shape[0]
    Kp, H1p, Hp = _round_up(K, 128), _round_up(H1, 128), _round_up(H, 128)
    Vc = min(vocab_chunk, _round_up(V, 8))
    Vp = _round_up(V, Vc)
    bf = jnp.bfloat16
    return {
        "w1": jnp.zeros((Kp, H1p), bf).at[:K, :H1].set(w1.astype(bf)),
        "b1": jnp.zeros((1, H1p), jnp.float32).at[:, :H1].set(b1),
        "w2": jnp.zeros((H1p, Hp), bf).at[:H1, :H].set(w2.astype(bf)),
        "b2": jnp.zeros((1, Hp), jnp.float32).at[:, :H].set(b2),
        "embed_table": jnp.zeros((Vp, Hp), bf).at[:V, :H].set(table.astype(bf)),
        "hidden_size": H,
        "vocab_chunk": Vc,
    }


if __name__ == "__main__":
    B, FEATURE_SIZE, HIDDEN, T, VOCAB = 2, 32, 128, 8, 512

    key = jax.random.PRNGKey(0)
    kp, kf, ka, kt = jax.random.split(key, 4)

    raw = init_params(kp, FEATURE_SIZE, HIDDEN, VOCAB)
    params = prepare_params(raw)
    image_features = jax.random.normal(kf, (B, FEATURE_SIZE), jnp.float32)
    attitude = jax.random.normal(ka, (B, 1), jnp.float32)
    previous_tokens = jax.random.randint(kt, (B, T), 0, VOCAB, dtype=jnp.int32)

    out = generate_embeddings(previous_tokens, image_features, attitude, params)
    out = jax.block_until_ready(out)

    # pure-JAX f32 reference (unpadded weights, exact indexed gather)
    feats = jnp.concatenate([image_features, attitude], axis=1)
    h = feats @ raw["w1"] + raw["b1"]
    h = 0.5 * h * (1.0 + jax.lax.erf(h / jnp.sqrt(2.0)))
    ref_start = h @ raw["w2"] + raw["b2"]
    ref = jnp.concatenate(
        [ref_start[:, None, :], raw["embed_table"][previous_tokens]], axis=1)

    assert out.shape == (B, T + 1, HIDDEN)
    # bf16 weights/table (f32 accumulation) round the 0.02-scale values through
    # the MXU -> ~1e-4 abs error vs the f32 indexed-gather reference.
    err = float(jnp.max(jnp.abs(out - ref)))
    assert err < 1e-3, err
    print("KERNEL_OK")
</pallas_src>

<mosaic_0001>
module attributes {stable_mosaic.version = 11 : i64} {
  func.func @_fused_embed_kernel(%arg0: i32, %arg1: i32, %arg2: memref<18x1xi32, #tpu.memory_space<vmem>>, %arg3: memref<2x128xf32, #tpu.memory_space<vmem>>, %arg4: memref<128x128xbf16, #tpu.memory_space<vmem>>, %arg5: memref<1x128xf32, #tpu.memory_space<vmem>>, %arg6: memref<128x128xbf16, #tpu.memory_space<vmem>>, %arg7: memref<1x128xf32, #tpu.memory_space<vmem>>, %arg8: memref<512x128xbf16, #tpu.memory_space<vmem>>, %arg9: memref<18x128xf32, #tpu.memory_space<vmem>>) attributes {dimension_semantics = [#tpu.dimension_semantics<parallel>, #tpu.dimension_semantics<arbitrary>], iteration_bounds = array<i64: 1, 1>, scalar_prefetch = 0 : i64, scratch_operands = 0 : i64, tpu.core_type = #tpu.core_type<tc>, window_params = [{transform_indices = @transform_0, window_bounds = array<i64: 18, 1>}, {transform_indices = @transform_1, window_bounds = array<i64: 2, 128>}, {pipeline_mode = #tpu.pipeline_mode<synchronous>, transform_indices = @transform_2, window_bounds = array<i64: 128, 128>}, {pipeline_mode = #tpu.pipeline_mode<synchronous>, transform_indices = @transform_3, window_bounds = array<i64: 1, 128>}, {pipeline_mode = #tpu.pipeline_mode<synchronous>, transform_indices = @transform_4, window_bounds = array<i64: 128, 128>}, {pipeline_mode = #tpu.pipeline_mode<synchronous>, transform_indices = @transform_5, window_bounds = array<i64: 1, 128>}, {transform_indices = @transform_6, window_bounds = array<i64: 512, 128>}, {transform_indices = @transform_7, window_bounds = array<i64: 18, 128>}]} {
    %c0 = arith.constant 0 : index
    %c0_0 = arith.constant 0 : index
    %0 = vector.load %arg2[%c0, %c0_0] : memref<18x1xi32, #tpu.memory_space<vmem>>, vector<18x1xi32>
    %c512_i32 = arith.constant 512 : i32
    %1 = arith.muli %arg1, %c512_i32 : i32
    %2 = vector.broadcast %1 : i32 to vector<18x1xi32>
    %3 = arith.subi %0, %2 : vector<18x1xi32>
    %4 = tpu.iota {dimensions = array<i32: 1>} : vector<1x512xi32>
    %5 = vector.broadcast %4 : vector<1x512xi32> to vector<18x512xi32>
    %6 = vector.broadcast %3 : vector<18x1xi32> to vector<18x512xi32>
    %7 = arith.cmpi eq, %5, %6 : vector<18x512xi32>
    %8 = arith.extui %7 : vector<18x512xi1> to vector<18x512xi32>
    %9 = arith.sitofp %8 : vector<18x512xi32> to vector<18x512xf32>
    %10 = arith.truncf %9 : vector<18x512xf32> to vector<18x512xbf16>
    %c0_1 = arith.constant 0 : index
    %c0_2 = arith.constant 0 : index
    %11 = vector.load %arg8[%c0_1, %c0_2] : memref<512x128xbf16, #tpu.memory_space<vmem>>, vector<512x128xbf16>
    %cst = arith.constant dense<0.000000e+00> : vector<18x128xf32>
    %12 = tpu.matmul %10, %11, %cst {dimension_numbers = #tpu.dot_dimension_numbers<[1], [0], [0], [1], [0, 0, 1, 1], [], []>} : vector<18x512xbf16>, vector<512x128xbf16>, vector<18x128xf32> -> vector<18x128xf32>
    %c0_i32 = arith.constant 0 : i32
    %13 = arith.cmpi eq, %arg1, %c0_i32 : i32
    %14 = arith.extui %13 : i1 to i32
    %c0_i32_3 = arith.constant 0 : i32
    %15 = arith.cmpi ne, %14, %c0_i32_3 : i32
    scf.if %15 {
      %c0_8 = arith.constant 0 : index
      %c0_9 = arith.constant 0 : index
      %22 = vector.load %arg9[%c0_8, %c0_9] : memref<18x128xf32, #tpu.memory_space<vmem>>, vector<18x128xf32>
      tpu.vector_store %arg9[%c0_8, %c0_9], %12 {strides = array<i32>} : memref<18x128xf32, #tpu.memory_space<vmem>>, vector<18x128xf32>,
    } else {
    }
    %c0_i32_4 = arith.constant 0 : i32
    %16 = arith.cmpi sgt, %arg1, %c0_i32_4 : i32
    %17 = arith.extui %16 : i1 to i32
    %c0_i32_5 = arith.constant 0 : i32
    %18 = arith.cmpi ne, %17, %c0_i32_5 : i32
    scf.if %18 {
      %c0_8 = arith.constant 0 : index
      %c0_9 = arith.constant 0 : index
      %22 = vector.load %arg9[%c0_8, %c0_9] : memref<18x128xf32, #tpu.memory_space<vmem>>, vector<18x128xf32>
      %23 = arith.addf %22, %12 : vector<18x128xf32>
      %c0_10 = arith.constant 0 : index
      %c0_11 = arith.constant 0 : index
      %24 = vector.load %arg9[%c0_10, %c0_11] : memref<18x128xf32, #tpu.memory_space<vmem>>, vector<18x128xf32>
      tpu.vector_store %arg9[%c0_10, %c0_11], %23 {strides = array<i32>} : memref<18x128xf32, #tpu.memory_space<vmem>>, vector<18x128xf32>,
    } else {
    }
    %c0_i32_6 = arith.constant 0 : i32
    %19 = arith.cmpi eq, %arg1, %c0_i32_6 : i32
    %20 = arith.extui %19 : i1 to i32
    %c0_i32_7 = arith.constant 0 : i32
    %21 = arith.cmpi ne, %20, %c0_i32_7 : i32
    scf.if %21 {
      %c0_8 = arith.constant 0 : index
      %c0_9 = arith.constant 0 : index
      %22 = vector.load %arg3[%c0_8, %c0_9] : memref<2x128xf32, #tpu.memory_space<vmem>>, vector<2x128xf32>
      %23 = arith.truncf %22 : vector<2x128xf32> to vector<2x128xbf16>
      %c0_10 = arith.constant 0 : index
      %c0_11 = arith.constant 0 : index
      %24 = vector.load %arg4[%c0_10, %c0_11] : memref<128x128xbf16, #tpu.memory_space<vmem>>, vector<128x128xbf16>
      %cst_12 = arith.constant dense<0.000000e+00> : vector<2x128xf32>
      %25 = tpu.matmul %23, %24, %cst_12 {dimension_numbers = #tpu.dot_dimension_numbers<[1], [0], [0], [1], [0, 0, 1, 1], [], []>} : vector<2x128xbf16>, vector<128x128xbf16>, vector<2x128xf32> -> vector<2x128xf32>
      %c0_13 = arith.constant 0 : index
      %c0_14 = arith.constant 0 : index
      %26 = vector.load %arg5[%c0_13, %c0_14] : memref<1x128xf32, #tpu.memory_space<vmem>>, vector<1x128xf32>
      %27 = vector.broadcast %26 : vector<1x128xf32> to vector<2x128xf32>
      %28 = arith.addf %25, %27 : vector<2x128xf32>
      %cst_15 = arith.constant 5.000000e-01 : f32
      %29 = vector.broadcast %cst_15 : f32 to vector<2x128xf32>
      %30 = arith.mulf %29, %28 : vector<2x128xf32>
      %cst_16 = arith.constant 0.707106769 : f32
      %31 = vector.broadcast %cst_16 : f32 to vector<2x128xf32>
      %32 = arith.mulf %28, %31 : vector<2x128xf32>
      %33 = math.erf %32 : vector<2x128xf32>
      %cst_17 = arith.constant 1.000000e+00 : f32
      %34 = vector.broadcast %cst_17 : f32 to vector<2x128xf32>
      %35 = arith.addf %34, %33 : vector<2x128xf32>
      %36 = arith.mulf %30, %35 : vector<2x128xf32>
      %37 = arith.truncf %36 : vector<2x128xf32> to vector<2x128xbf16>
      %c0_18 = arith.constant 0 : index
      %c0_19 = arith.constant 0 : index
      %38 = vector.load %arg6[%c0_18, %c0_19] : memref<128x128xbf16, #tpu.memory_space<vmem>>, vector<128x128xbf16>
      %cst_20 = arith.constant dense<0.000000e+00> : vector<2x128xf32>
      %39 = tpu.matmul %37, %38, %cst_20 {dimension_numbers = #tpu.dot_dimension_numbers<[1], [0], [0], [1], [0, 0, 1, 1], [], []>} : vector<2x128xbf16>, vector<128x128xbf16>, vector<2x128xf32> -> vector<2x128xf32>
      %c0_21 = arith.constant 0 : index
      %c0_22 = arith.constant 0 : index
      %40 = vector.load %arg7[%c0_21, %c0_22] : memref<1x128xf32, #tpu.memory_space<vmem>>, vector<1x128xf32>
      %41 = vector.broadcast %40 : vector<1x128xf32> to vector<2x128xf32>
      %42 = arith.addf %39, %41 : vector<2x128xf32>
      %43 = vector.extract_strided_slice %42 {offsets = [0, 0], sizes = [1, 128], strides = [1, 1]} : vector<2x128xf32> to vector<1x128xf32>
      %c0_23 = arith.constant 0 : index
      %c0_24 = arith.constant 0 : index
      %44 = vector.load %arg9[%c0_23, %c0_24] : memref<18x128xf32, #tpu.memory_space<vmem>>, vector<1x128xf32>
      tpu.vector_store %arg9[%c0_23, %c0_24], %43 {strides = array<i32>} : memref<18x128xf32, #tpu.memory_space<vmem>>, vector<1x128xf32>,
      %45 = vector.extract_strided_slice %42 {offsets = [1, 0], sizes = [1, 128], strides = [1, 1]} : vector<2x128xf32> to vector<1x128xf32>
      %c9 = arith.constant 9 : index
      %c0_25 = arith.constant 0 : index
      %46 = vector.load %arg9[%c9, %c0_25] : memref<18x128xf32, #tpu.memory_space<vmem>>, vector<1x128xf32>
      tpu.vector_store %arg9[%c9, %c0_25], %45 {strides = array<i32>} : memref<18x128xf32, #tpu.memory_space<vmem>>, vector<1x128xf32>,
    } else {
    }
    return
  }
  func.func @transform_0(%arg0: i32, %arg1: i32) -> (i32, i32) {
    %c0_i32 = arith.constant 0 : i32
    %c0_i32_0 = arith.constant 0 : i32
    return %arg0, %c0_i32 : i32, i32
  }
  func.func @transform_1(%arg0: i32, %arg1: i32) -> (i32, i32) {
    %c0_i32 = arith.constant 0 : i32
    %c0_i32_0 = arith.constant 0 : i32
    return %arg0, %c0_i32 : i32, i32
  }
  func.func @transform_2(%arg0: i32, %arg1: i32) -> (i32, i32) {
    %c0_i32 = arith.constant 0 : i32
    %c0_i32_0 = arith.constant 0 : i32
    %c0_i32_1 = arith.constant 0 : i32
    return %c0_i32, %c0_i32_0 : i32, i32
  }
  func.func @transform_3(%arg0: i32, %arg1: i32) -> (i32, i32) {
    %c0_i32 = arith.constant 0 : i32
    %c0_i32_0 = arith.constant 0 : i32
    %c0_i32_1 = arith.constant 0 : i32
    return %c0_i32, %c0_i32_0 : i32, i32
  }
  func.func @transform_4(%arg0: i32, %arg1: i32) -> (i32, i32) {
    %c0_i32 = arith.constant 0 : i32
    %c0_i32_0 = arith.constant 0 : i32
    %c0_i32_1 = arith.constant 0 : i32
    return %c0_i32, %c0_i32_0 : i32, i32
  }
  func.func @transform_5(%arg0: i32, %arg1: i32) -> (i32, i32) {
    %c0_i32 = arith.constant 0 : i32
    %c0_i32_0 = arith.constant 0 : i32
    %c0_i32_1 = arith.constant 0 : i32
    return %c0_i32, %c0_i32_0 : i32, i32
  }
  func.func @transform_6(%arg0: i32, %arg1: i32) -> (i32, i32) {
    %c0_i32 = arith.constant 0 : i32
    %c0_i32_0 = arith.constant 0 : i32
    return %arg1, %c0_i32 : i32, i32
  }
  func.func @transform_7(%arg0: i32, %arg1: i32) -> (i32, i32) {
    %c0_i32 = arith.constant 0 : i32
    %c0_i32_0 = arith.constant 0 : i32
    return %arg0, %c0_i32 : i32, i32
  }
}

</mosaic_0001>

<llo_original>
// kernel: tpu_custom_call.1
$region0: #{tpu_custom_call.1}
  #allocation0 [shape = 'u32[]', space=smem, size = 0x4, offset = 0x4, fixed_abs, tag = 'smem constant byte address 0x4 - core index']
  #allocation1 [shape = 'u32[144,128]{1,0:T(1,128)}', space=vmem, size = 0x12000, scoped, tag = 'internal scratch']
  %s0 = inlined_call_operand.vmem [shape: s32[18,1], index: 0, kind: input, shape index: {}]
  %s1 = inlined_call_operand.vmem [shape: f32[2,128], index: 1, kind: input, shape index: {}]
  %s2 = inlined_call_operand.hbm [shape: bf16[128,128], index: 2, kind: input, shape index: {}]
  %s3 = inlined_call_operand.vmem [shape: f32[1,128], index: 3, kind: input, shape index: {}]
  %s4 = inlined_call_operand.hbm [shape: bf16[128,128], index: 4, kind: input, shape index: {}]
  %s5 = inlined_call_operand.vmem [shape: f32[1,128], index: 5, kind: input, shape index: {}]
  %s6 = inlined_call_operand.hbm [shape: bf16[512,128], index: 6, kind: input, shape index: {}]
  %s7 = inlined_call_operand.hbm [shape: f32[18,128], index: 7, kind: output, shape index: {}]
  %s8 = sld [smem:[#allocation0]]
  $region62: #{tpu_custom_call.1} parent=0
    _
  %s10 = ssub.s32 1, %s8
  %s11 = scalar_select 0, %s10, %s8
  $region1: #{tpu_custom_call.1} parent=0
    #allocation2 [shape = 'u8[32768]{0}', space=vmem, size = 0x8000, scoped, tag = 'input window, operand 2, single buffered']
    #allocation3 [shape = 's32[1]{0}', space=sflag, size = 0x4, scoped, tag = 'scoped memory for tpu_custom_call.1']
    #allocation4 [shape = 's32[1]{0}', space=sflag, size = 0x4, scoped, tag = 'scoped memory for tpu_custom_call.1']
    #allocation5 [shape = 'u8[32768]{0}', space=vmem, size = 0x8000, scoped, tag = 'input window, operand 4, single buffered']
    #allocation6 [shape = 's32[1]{0}', space=sflag, size = 0x4, scoped, tag = 'scoped memory for tpu_custom_call.1']
    #allocation7 [shape = 'u8[131072]{0}', space=vmem, size = 0x20000, scoped, tag = 'input window, operand 6, single buffered']
    #allocation8 [shape = 'u8[12288]{0}', space=vmem, size = 0x3000, scoped, tag = 'output window, operand 0, single buffered']
    %12 = vsyncpa [#allocation3], 0
    %13 = vsyncpa [#allocation6], 0
    %14 = vsyncpa [#allocation4], 0
    // Predicated region
    $region2: #{tpu_custom_call.1} parent=1 // pred_check
      _
    $region3: #{tpu_custom_call.1} parent=1 // pred_check_branch
      %16 = sbr.rel (0) target = $region5
    $region4: #{tpu_custom_call.1} parent=1 // pred_region
      _
    $region5: #{tpu_custom_call.1} parent=1 // pred_fallthru
      _
    // Predicated region
    $region6: #{tpu_custom_call.1} parent=1 // pred_check
      _
    $region7: #{tpu_custom_call.1} parent=1 // pred_check_branch
      %18 = sbr.rel (0) target = $region9
    $region8: #{tpu_custom_call.1} parent=1 // pred_region
      _
    $region9: #{tpu_custom_call.1} parent=1 // pred_fallthru
      _
    // Predicated region
    $region10: #{tpu_custom_call.1} parent=1 // pred_check
      _
    $region11: #{tpu_custom_call.1} parent=1 // pred_check_branch
      %20 = sbr.rel (0) target = $region13
    $region12: #{tpu_custom_call.1} parent=1 // pred_region
      %s22 = ssub.s32 1024, 1024
      %23 = vsyncadd [#allocation3], %s22
      %s24 = sshll.u32 [#allocation2], 4
      %s25 = int_to_ptr.vmem [resolvable:$true] %s24
      %30 = dma.hbm_to_vmem [thread:$0]  %s2, 1024, %s25, [#allocation3], 64, 64, 4
    $region13: #{tpu_custom_call.1} parent=1 // pred_fallthru
      _
    // Predicated region
    $region14: #{tpu_custom_call.1} parent=1 // pred_check
      _
    $region15: #{tpu_custom_call.1} parent=1 // pred_check_branch
      %32 = sbr.rel (0) target = $region17
    $region16: #{tpu_custom_call.1} parent=1 // pred_region
      _
    $region17: #{tpu_custom_call.1} parent=1 // pred_fallthru
      _
    // Predicated region
    $region18: #{tpu_custom_call.1} parent=1 // pred_check
      _
    $region19: #{tpu_custom_call.1} parent=1 // pred_check_branch
      %34 = sbr.rel (0) target = $region21
    $region20: #{tpu_custom_call.1} parent=1 // pred_region
      %s36 = ssub.s32 1024, 1024
      %37 = vsyncadd [#allocation6], %s36
      %s38 = sshll.u32 [#allocation5], 4
      %s39 = int_to_ptr.vmem [resolvable:$true] %s38
      %44 = dma.hbm_to_vmem [thread:$0]  %s4, 1024, %s39, [#allocation6], 64, 64, 4
    $region21: #{tpu_custom_call.1} parent=1 // pred_fallthru
      _
    // Predicated region
    $region22: #{tpu_custom_call.1} parent=1 // pred_check
      _
    $region23: #{tpu_custom_call.1} parent=1 // pred_check_branch
      %46 = sbr.rel (0) target = $region25
    $region24: #{tpu_custom_call.1} parent=1 // pred_region
      _
    $region25: #{tpu_custom_call.1} parent=1 // pred_fallthru
      _
    // Predicated region
    $region26: #{tpu_custom_call.1} parent=1 // pred_check
      _
    $region27: #{tpu_custom_call.1} parent=1 // pred_check_branch
      %48 = sbr.rel (0) target = $region29
    $region28: #{tpu_custom_call.1} parent=1 // pred_region
      %s50 = ssub.s32 4096, 4096
      %51 = vsyncadd [#allocation6], %s50
      %s52 = sshll.u32 [#allocation7], 4
      %s53 = int_to_ptr.vmem [resolvable:$true] %s52
      %58 = dma.hbm_to_vmem [thread:$0]  %s6, 4096, %s53, [#allocation6], 64, 64, 4
    $region29: #{tpu_custom_call.1} parent=1 // pred_fallthru
      _
    // Predicated region
    $region30: #{tpu_custom_call.1} parent=1 // pred_check
      _
    $region31: #{tpu_custom_call.1} parent=1 // pred_check_branch
      %60 = sbr.rel (0) target = $region33
    $region32: #{tpu_custom_call.1} parent=1 // pred_region
      %61 = dma.done [#allocation3], 1024
    $region33: #{tpu_custom_call.1} parent=1 // pred_fallthru
      _
    // Predicated region
    $region34: #{tpu_custom_call.1} parent=1 // pred_check
      _
    $region35: #{tpu_custom_call.1} parent=1 // pred_check_branch
      %63 = sbr.rel (0) target = $region37
    $region36: #{tpu_custom_call.1} parent=1 // pred_region
      %64 = dma.done [#allocation6], 1024
    $region37: #{tpu_custom_call.1} parent=1 // pred_fallthru
      _
    // Predicated region
    $region38: #{tpu_custom_call.1} parent=1 // pred_check
      _
    $region39: #{tpu_custom_call.1} parent=1 // pred_check_branch
      %66 = sbr.rel (0) target = $region41
    $region40: #{tpu_custom_call.1} parent=1 // pred_region
      %67 = dma.done [#allocation6], 4096
    $region41: #{tpu_custom_call.1} parent=1 // pred_fallthru
      _
    %v69 = vld [vmem:[%s0] sm:$0xff]
    %v70 = vld [vmem:[%s0 + $0x8] sm:$0xff]
    %v71 = vld [vmem:[%s0 + $0x10] sm:$0x3]
    %s72 = smul.u32 0, 512
    %v73 = vstv %s72
    %v74 = vsub.s32 %v69, %v73
    %v75 = vsub.s32 %v70, %v73
    %v76 = vsub.s32 %v71, %v73
    %v77 = vlaneseq
    %v78 = vand.u32 %v77, 127
    %v79 = vadd.s32 %v78, 128
    %v80 = vadd.s32 %v78, 256
    %v81 = vadd.s32 %v78, 384
    %82 = vset.pattern.permute.xlu0 0
    %83 = vperm.xlu0 %82, %v74
    %v84 = vpop.permute.xlu0 %83
    %85 = vset.pattern.permute.xlu0 0
    %86 = vperm.xlu0 %85, %v75
    %v87 = vpop.permute.xlu0 %86
    %88 = vset.pattern.permute.xlu0 0
    %89 = vperm.xlu0 %88, %v76
    %v90 = vpop.permute.xlu0 %89
    %vm91 = vcmp.eq.s32.totalorder %v78, %v84
    %vm92 = vcmp.eq.s32.totalorder %v79, %v84
    %vm93 = vcmp.eq.s32.totalorder %v80, %v84
    %vm94 = vcmp.eq.s32.totalorder %v81, %v84
    %vm95 = vcmp.eq.s32.totalorder %v78, %v87
    %vm96 = vcmp.eq.s32.totalorder %v79, %v87
    %vm97 = vcmp.eq.s32.totalorder %v80, %v87
    %vm98 = vcmp.eq.s32.totalorder %v81, %v87
    %vm99 = vcmp.eq.s32.totalorder %v78, %v90
    %vm100 = vcmp.eq.s32.totalorder %v79, %v90
    %vm101 = vcmp.eq.s32.totalorder %v80, %v90
    %vm102 = vcmp.eq.s32.totalorder %v81, %v90
    %v103 = vsel %vm91, 1, 0
    %v104 = vsel %vm92, 1, 0
    %v105 = vsel %vm93, 1, 0
    %v106 = vsel %vm94, 1, 0
    %v107 = vsel %vm95, 1, 0
    %v108 = vsel %vm96, 1, 0
    %v109 = vsel %vm97, 1, 0
    %v110 = vsel %vm98, 1, 0
    %v111 = vsel %vm99, 1, 0
    %v112 = vsel %vm100, 1, 0
    %v113 = vsel %vm101, 1, 0
    %v114 = vsel %vm102, 1, 0
    %v115 = vcvt.s32.f32 %v103
    %v116 = vcvt.s32.f32 %v104
    %v117 = vcvt.s32.f32 %v105
    %v118 = vcvt.s32.f32 %v106
    %v119 = vcvt.s32.f32 %v107
    %v120 = vcvt.s32.f32 %v108
    %v121 = vcvt.s32.f32 %v109
    %v122 = vcvt.s32.f32 %v110
    %v123 = vcvt.s32.f32 %v111
    %v124 = vcvt.s32.f32 %v112
    %v125 = vcvt.s32.f32 %v113
    %v126 = vcvt.s32.f32 %v114
    %v127 = vpack.c.bf16 %v119, %v115
    %v128 = vpack.c.bf16 %v120, %v116
    %v129 = vpack.c.bf16 %v121, %v117
    %v130 = vpack.c.bf16 %v122, %v118
    %v131 = vpack.c.bf16 %v123, %v123
    %v132 = vpack.c.bf16 %v124, %v124
    %v133 = vpack.c.bf16 %v125, %v125
    %v134 = vpack.c.bf16 %v126, %v126
    %v135 = vld [vmem:[#allocation7] sm:$0xf]
    %v136 = vld [vmem:[#allocation7 + $0x4] sm:$0xf]
    %v137 = vld [vmem:[#allocation7 + $0x8] sm:$0xf]
    %v138 = vld [vmem:[#allocation7 + $0xc] sm:$0xf]
    %v139 = vld [vmem:[#allocation7 + $0x10] sm:$0xf]
    %v140 = vld [vmem:[#allocation7 + $0x14] sm:$0xf]
    %v141 = vld [vmem:[#allocation7 + $0x18] sm:$0xf]
    %v142 = vld [vmem:[#allocation7 + $0x1c] sm:$0xf]
    %v143 = vld [vmem:[#allocation7 + $0x20] sm:$0xf]
    %v144 = vld [vmem:[#allocation7 + $0x24] sm:$0xf]
    %v145 = vld [vmem:[#allocation7 + $0x28] sm:$0xf]
    %v146 = vld [vmem:[#allocation7 + $0x2c] sm:$0xf]
    %v147 = vld [vmem:[#allocation7 + $0x30] sm:$0xf]
    %v148 = vld [vmem:[#allocation7 + $0x34] sm:$0xf]
    %v149 = vld [vmem:[#allocation7 + $0x38] sm:$0xf]
    %v150 = vld [vmem:[#allocation7 + $0x3c] sm:$0xf]
    %v151 = vld [vmem:[#allocation7 + $0x40] sm:$0xf]
    %v152 = vld [vmem:[#allocation7 + $0x44] sm:$0xf]
    %v153 = vld [vmem:[#allocation7 + $0x48] sm:$0xf]
    %v154 = vld [vmem:[#allocation7 + $0x4c] sm:$0xf]
    %v155 = vld [vmem:[#allocation7 + $0x50] sm:$0xf]
    %v156 = vld [vmem:[#allocation7 + $0x54] sm:$0xf]
    %v157 = vld [vmem:[#allocation7 + $0x58] sm:$0xf]
    %v158 = vld [vmem:[#allocation7 + $0x5c] sm:$0xf]
    %v159 = vld [vmem:[#allocation7 + $0x60] sm:$0xf]
    %v160 = vld [vmem:[#allocation7 + $0x64] sm:$0xf]
    %v161 = vld [vmem:[#allocation7 + $0x68] sm:$0xf]
    %v162 = vld [vmem:[#allocation7 + $0x6c] sm:$0xf]
    %v163 = vld [vmem:[#allocation7 + $0x70] sm:$0xf]
    %v164 = vld [vmem:[#allocation7 + $0x74] sm:$0xf]
    %v165 = vld [vmem:[#allocation7 + $0x78] sm:$0xf]
    %v166 = vld [vmem:[#allocation7 + $0x7c] sm:$0xf]
    %v167 = vld [vmem:[#allocation7 + $0x80] sm:$0xf]
    %v168 = vld [vmem:[#allocation7 + $0x84] sm:$0xf]
    %v169 = vld [vmem:[#allocation7 + $0x88] sm:$0xf]
    %v170 = vld [vmem:[#allocation7 + $0x8c] sm:$0xf]
    %v171 = vld [vmem:[#allocation7 + $0x90] sm:$0xf]
    %v172 = vld [vmem:[#allocation7 + $0x94] sm:$0xf]
    %v173 = vld [vmem:[#allocation7 + $0x98] sm:$0xf]
    %v174 = vld [vmem:[#allocation7 + $0x9c] sm:$0xf]
    %v175 = vld [vmem:[#allocation7 + $0xa0] sm:$0xf]
    %v176 = vld [vmem:[#allocation7 + $0xa4] sm:$0xf]
    %v177 = vld [vmem:[#allocation7 + $0xa8] sm:$0xf]
    %v178 = vld [vmem:[#allocation7 + $0xac] sm:$0xf]
    %v179 = vld [vmem:[#allocation7 + $0xb0] sm:$0xf]
    %v180 = vld [vmem:[#allocation7 + $0xb4] sm:$0xf]
    %v181 = vld [vmem:[#allocation7 + $0xb8] sm:$0xf]
    %v182 = vld [vmem:[#allocation7 + $0xbc] sm:$0xf]
    %v183 = vld [vmem:[#allocation7 + $0xc0] sm:$0xf]
    %v184 = vld [vmem:[#allocation7 + $0xc4] sm:$0xf]
    %v185 = vld [vmem:[#allocation7 + $0xc8] sm:$0xf]
    %v186 = vld [vmem:[#allocation7 + $0xcc] sm:$0xf]
    %v187 = vld [vmem:[#allocation7 + $0xd0] sm:$0xf]
    %v188 = vld [vmem:[#allocation7 + $0xd4] sm:$0xf]
    %v189 = vld [vmem:[#allocation7 + $0xd8] sm:$0xf]
    %v190 = vld [vmem:[#allocation7 + $0xdc] sm:$0xf]
    %v191 = vld [vmem:[#allocation7 + $0xe0] sm:$0xf]
    %v192 = vld [vmem:[#allocation7 + $0xe4] sm:$0xf]
    %v193 = vld [vmem:[#allocation7 + $0xe8] sm:$0xf]
    %v194 = vld [vmem:[#allocation7 + $0xec] sm:$0xf]
    %v195 = vld [vmem:[#allocation7 + $0xf0] sm:$0xf]
    %v196 = vld [vmem:[#allocation7 + $0xf4] sm:$0xf]
    %v197 = vld [vmem:[#allocation7 + $0xf8] sm:$0xf]
    %v198 = vld [vmem:[#allocation7 + $0xfc] sm:$0xf]
    %v263 = vunpack.c.l.b16 %v135
    %v264 = vunpack.c.l.b16 %v136
    %v265 = vunpack.c.l.b16 %v137
    %v266 = vunpack.c.l.b16 %v138
    %v267 = vunpack.c.l.b16 %v139
    %v268 = vunpack.c.l.b16 %v140
    %v269 = vunpack.c.l.b16 %v141
    %v270 = vunpack.c.l.b16 %v142
    %v271 = vunpack.c.l.b16 %v143
    %v272 = vunpack.c.l.b16 %v144
    %v273 = vunpack.c.l.b16 %v145
    %v274 = vunpack.c.l.b16 %v146
    %v275 = vunpack.c.l.b16 %v147
    %v276 = vunpack.c.l.b16 %v148
    %v277 = vunpack.c.l.b16 %v149
    %v278 = vunpack.c.l.b16 %v150
    %v279 = vunpack.c.l.b16 %v151
    %v280 = vunpack.c.l.b16 %v152
    %v281 = vunpack.c.l.b16 %v153
    %v282 = vunpack.c.l.b16 %v154
    %v283 = vunpack.c.l.b16 %v155
    %v284 = vunpack.c.l.b16 %v156
    %v285 = vunpack.c.l.b16 %v157
    %v286 = vunpack.c.l.b16 %v158
    %v287 = vunpack.c.l.b16 %v159
    %v288 = vunpack.c.l.b16 %v160
    %v289 = vunpack.c.l.b16 %v161
    %v290 = vunpack.c.l.b16 %v162
    %v291 = vunpack.c.l.b16 %v163
    %v292 = vunpack.c.l.b16 %v164
    %v293 = vunpack.c.l.b16 %v165
    %v294 = vunpack.c.l.b16 %v166
    %v295 = vunpack.c.l.b16 %v167
    %v296 = vunpack.c.l.b16 %v168
    %v297 = vunpack.c.l.b16 %v169
    %v298 = vunpack.c.l.b16 %v170
    %v299 = vunpack.c.l.b16 %v171
    %v300 = vunpack.c.l.b16 %v172
    %v301 = vunpack.c.l.b16 %v173
    %v302 = vunpack.c.l.b16 %v174
    %v303 = vunpack.c.l.b16 %v175
    %v304 = vunpack.c.l.b16 %v176
    %v305 = vunpack.c.l.b16 %v177
    %v306 = vunpack.c.l.b16 %v178
    %v307 = vunpack.c.l.b16 %v179
    %v308 = vunpack.c.l.b16 %v180
    %v309 = vunpack.c.l.b16 %v181
    %v310 = vunpack.c.l.b16 %v182
    %v311 = vunpack.c.l.b16 %v183
    %v312 = vunpack.c.l.b16 %v184
    %v313 = vunpack.c.l.b16 %v185
    %v314 = vunpack.c.l.b16 %v186
    %v315 = vunpack.c.l.b16 %v187
    %v316 = vunpack.c.l.b16 %v188
    %v317 = vunpack.c.l.b16 %v189
    %v318 = vunpack.c.l.b16 %v190
    %v319 = vunpack.c.l.b16 %v191
    %v320 = vunpack.c.l.b16 %v192
    %v321 = vunpack.c.l.b16 %v193
    %v322 = vunpack.c.l.b16 %v194
    %v323 = vunpack.c.l.b16 %v195
    %v324 = vunpack.c.l.b16 %v196
    %v325 = vunpack.c.l.b16 %v197
    %v326 = vunpack.c.l.b16 %v198
    %v327 = vpack.c.b16 %v264, %v263
    %v328 = vpack.c.b16 %v266, %v265
    %v329 = vpack.c.b16 %v268, %v267
    %v330 = vpack.c.b16 %v270, %v269
    %v331 = vpack.c.b16 %v272, %v271
    %v332 = vpack.c.b16 %v274, %v273
    %v333 = vpack.c.b16 %v276, %v275
    %v334 = vpack.c.b16 %v278, %v277
    %v335 = vpack.c.b16 %v280, %v279
    %v336 = vpack.c.b16 %v282, %v281
    %v337 = vpack.c.b16 %v284, %v283
    %v338 = vpack.c.b16 %v286, %v285
    %v339 = vpack.c.b16 %v288, %v287
    %v340 = vpack.c.b16 %v290, %v289
    %v341 = vpack.c.b16 %v292, %v291
    %v342 = vpack.c.b16 %v294, %v293
    %v343 = vpack.c.b16 %v296, %v295
    %v344 = vpack.c.b16 %v298, %v297
    %v345 = vpack.c.b16 %v300, %v299
    %v346 = vpack.c.b16 %v302, %v301
    %v347 = vpack.c.b16 %v304, %v303
    %v348 = vpack.c.b16 %v306, %v305
    %v349 = vpack.c.b16 %v308, %v307
    %v350 = vpack.c.b16 %v310, %v309
    %v351 = vpack.c.b16 %v312, %v311
    %v352 = vpack.c.b16 %v314, %v313
    %v353 = vpack.c.b16 %v316, %v315
    %v354 = vpack.c.b16 %v318, %v317
    %v355 = vpack.c.b16 %v320, %v319
    %v356 = vpack.c.b16 %v322, %v321
    %v357 = vpack.c.b16 %v324, %v323
    %v358 = vpack.c.b16 %v326, %v325
    %391 = vmatprep.subr.bf16.mxu0 0
    %392 = vmatpush1.bf16.msra.mxu0 %v334
    %393 = vmatprep.subr.bf16.mxu0 0
    %394 = vmatpush1.bf16.msra.mxu0 %v333
    %395 = vmatprep.subr.bf16.mxu0 0
    %396 = vmatpush1.bf16.msra.mxu0 %v332
    %397 = vmatprep.subr.bf16.mxu0 0
    %398 = vmatpush1.bf16.msra.mxu0 %v331
    %399 = vmatprep.subr.bf16.mxu0 0
    %400 = vmatpush1.bf16.msra.mxu0 %v330
    %401 = vmatprep.subr.bf16.mxu0 0
    %402 = vmatpush1.bf16.msra.mxu0 %v329
    %403 = vmatprep.subr.bf16.mxu0 0
    %404 = vmatpush1.bf16.msra.mxu0 %v328
    %405 = vmatprep.subr.bf16.mxu0 0
    %406 = vmatpush1.bf16.msra.mxu0 %v327
    %407 = vmatprep.subr.bf16.mxu0 0
    %408 = vmatpush2.bf16.msra.mxu0 %v342
    %409 = vmatprep.subr.bf16.mxu0 0
    %410 = vmatpush2.bf16.msra.mxu0 %v341
    %411 = vmatprep.subr.bf16.mxu0 0
    %412 = vmatpush2.bf16.msra.mxu0 %v340
    %413 = vmatprep.subr.bf16.mxu0 0
    %414 = vmatpush2.bf16.msra.mxu0 %v339
    %415 = vmatprep.subr.bf16.mxu0 0
    %416 = vmatpush2.bf16.msra.mxu0 %v338
    %417 = vmatprep.subr.bf16.mxu0 0
    %418 = vmatpush2.bf16.msra.mxu0 %v337
    %419 = vmatprep.subr.bf16.mxu0 0
    %420 = vmatpush2.bf16.msra.mxu0 %v336
    %421 = vmatprep.subr.bf16.mxu0 0
    %422 = vmatpush2.bf16.msra.mxu0 %v335
    %423 = vmatprep.mubr.bf16.mxu0 %v128
    %424 = vmatmul.mubr.bf16.gmra.mxu0 %v127
    %v425 = vpop.f32.mrf.mxu0
    %v426 = vadd.f32 0.0, %v425
    %v427 = vpop.f32.mrf.mxu0
    %v428 = vpop.f32.mrf.mxu0
    %v429 = vadd.f32 0.0, %v428
    %v430 = vpop.f32.mrf.mxu0
    %431 = vmatprep.mubr.bf16.mxu0 %v132
    %432 = vmatmul.mubr.bf16.gmra.mxu0 %v131
    %v433 = vpop.f32.mrf.mxu0
    %v434 = vadd.f32 0.0, %v433
    %v435 = vpop.f32.mrf.mxu0
    %v436 = vpop.f32.mrf.mxu0
    %v437 = vpop.f32.mrf.mxu0
    %438 = vdwg.mxu0
    %439 = vmatprep.subr.bf16.mxu0 0
    %440 = vmatpush1.bf16.msra.mxu0 %v350
    %441 = vmatprep.subr.bf16.mxu0 0
    %442 = vmatpush1.bf16.msra.mxu0 %v349
    %443 = vmatprep.subr.bf16.mxu0 0
    %444 = vmatpush1.bf16.msra.mxu0 %v348
    %445 = vmatprep.subr.bf16.mxu0 0
    %446 = vmatpush1.bf16.msra.mxu0 %v347
    %447 = vmatprep.subr.bf16.mxu0 0
    %448 = vmatpush1.bf16.msra.mxu0 %v346
    %449 = vmatprep.subr.bf16.mxu0 0
    %450 = vmatpush1.bf16.msra.mxu0 %v345
    %451 = vmatprep.subr.bf16.mxu0 0
    %452 = vmatpush1.bf16.msra.mxu0 %v344
    %453 = vmatprep.subr.bf16.mxu0 0
    %454 = vmatpush1.bf16.msra.mxu0 %v343
    %455 = vmatprep.subr.bf16.mxu0 0
    %456 = vmatpush2.bf16.msra.mxu0 %v358
    %457 = vmatprep.subr.bf16.mxu0 0
    %458 = vmatpush2.bf16.msra.mxu0 %v357
    %459 = vmatprep.subr.bf16.mxu0 0
    %460 = vmatpush2.bf16.msra.mxu0 %v356
    %461 = vmatprep.subr.bf16.mxu0 0
    %462 = vmatpush2.bf16.msra.mxu0 %v355
    %463 = vmatprep.subr.bf16.mxu0 0
    %464 = vmatpush2.bf16.msra.mxu0 %v354
    %465 = vmatprep.subr.bf16.mxu0 0
    %466 = vmatpush2.bf16.msra.mxu0 %v353
    %467 = vmatprep.subr.bf16.mxu0 0
    %468 = vmatpush2.bf16.msra.mxu0 %v352
    %469 = vmatprep.subr.bf16.mxu0 0
    %470 = vmatpush2.bf16.msra.mxu0 %v351
    %471 = vmatprep.mubr.bf16.mxu0 %v130
    %472 = vmatmul.mubr.bf16.gmra.mxu0 %v129
    %v473 = vpop.f32.mrf.mxu0
    %v474 = vadd.f32 %v426, %v473
    %v475 = vpop.f32.mrf.mxu0
    %v476 = vpop.f32.mrf.mxu0
    %v477 = vadd.f32 %v429, %v476
    %v478 = vpop.f32.mrf.mxu0
    %479 = vmatprep.mubr.bf16.mxu0 %v134
    %480 = vmatmul.mubr.bf16.gmra.mxu0 %v133
    %v481 = vpop.f32.mrf.mxu0
    %v482 = vadd.f32 %v434, %v481
    %v483 = vpop.f32.mrf.mxu0
    %v484 = vpop.f32.mrf.mxu0
    %v485 = vpop.f32.mrf.mxu0
    %486 = vdwg.mxu0
    %p487 = scmp.eq.s32.totalorder 0, 0
    // Predicated region
    $region42: #{tpu_custom_call.1} parent=1 // pred_check
      %p488 = pneg %p487
    $region43: #{tpu_custom_call.1} parent=1 // pred_check_branch
      %490 = sbr.rel (%p488) target = $region45
    $region44: #{tpu_custom_call.1} parent=1 // pred_region
      %491 = vst [vmem:[#allocation8] sm:$0xff] %v474
      %492 = vst [vmem:[#allocation8 + $0x8] sm:$0xff] %v477
      %493 = vst [vmem:[#allocation8 + $0x10] sm:$0x3] %v482
    $region45: #{tpu_custom_call.1} parent=1 // pred_fallthru
      _
    %p494 = scmp.gt.s32.totalorder 0, 0
    // Predicated region
    $region46: #{tpu_custom_call.1} parent=1 // pred_check
      %p495 = pneg %p494
    $region47: #{tpu_custom_call.1} parent=1 // pred_check_branch
      %497 = sbr.rel (%p495) target = $region49
    $region48: #{tpu_custom_call.1} parent=1 // pred_region
      %v498 = vld [vmem:[#allocation8] sm:$0xff]
      %v499 = vld [vmem:[#allocation8 + $0x8] sm:$0xff]
      %v500 = vld [vmem:[#allocation8 + $0x10] sm:$0x3]
      %v501 = vadd.f32 %v498, %v474
      %v502 = vadd.f32 %v499, %v477
      %v503 = vadd.f32 %v500, %v482
      %504 = vst [vmem:[#allocation8] sm:$0xff] %v501
      %505 = vst [vmem:[#allocation8 + $0x8] sm:$0xff] %v502
      %506 = vst [vmem:[#allocation8 + $0x10] sm:$0x3] %v503
    $region49: #{tpu_custom_call.1} parent=1 // pred_fallthru
      _
    // Predicated region
    $region50: #{tpu_custom_call.1} parent=1 // pred_check
      %p507 = pneg %p487
    $region51: #{tpu_custom_call.1} parent=1 // pred_check_branch
      %509 = sbr.rel (%p507) target = $region53
    $region52: #{tpu_custom_call.1} parent=1 // pred_region
      %v510 = vld [vmem:[%s1] sm:$0x3]
      %v511 = vpack.c.bf16 %v510, %v510
      %v512 = vld [vmem:[#allocation2] sm:$0xf]
      %v513 = vld [vmem:[#allocation2 + $0x4] sm:$0xf]
      %v514 = vld [vmem:[#allocation2 + $0x8] sm:$0xf]
      %v515 = vld [vmem:[#allocation2 + $0xc] sm:$0xf]
      %v516 = vld [vmem:[#allocation2 + $0x10] sm:$0xf]
      %v517 = vld [vmem:[#allocation2 + $0x14] sm:$0xf]
      %v518 = vld [vmem:[#allocation2 + $0x18] sm:$0xf]
      %v519 = vld [vmem:[#allocation2 + $0x1c] sm:$0xf]
      %v520 = vld [vmem:[#allocation2 + $0x20] sm:$0xf]
      %v521 = vld [vmem:[#allocation2 + $0x24] sm:$0xf]
      %v522 = vld [vmem:[#allocation2 + $0x28] sm:$0xf]
      %v523 = vld [vmem:[#allocation2 + $0x2c] sm:$0xf]
      %v524 = vld [vmem:[#allocation2 + $0x30] sm:$0xf]
      %v525 = vld [vmem:[#allocation2 + $0x34] sm:$0xf]
      %v526 = vld [vmem:[#allocation2 + $0x38] sm:$0xf]
      %v527 = vld [vmem:[#allocation2 + $0x3c] sm:$0xf]
      %v528 = vld [vmem:[%s3] sm:$0x1]
      %v530 = vlaneseq
      %v531 = vshrl.u32 %v530, 7
      %v532 = vsub.s32 0, %v531
      %v533 = vrot.slane %v528, %v532
      %v551 = vunpack.c.l.b16 %v512
      %v552 = vunpack.c.l.b16 %v513
      %v553 = vunpack.c.l.b16 %v514
      %v554 = vunpack.c.l.b16 %v515
      %v555 = vunpack.c.l.b16 %v516
      %v556 = vunpack.c.l.b16 %v517
      %v557 = vunpack.c.l.b16 %v518
      %v558 = vunpack.c.l.b16 %v519
      %v559 = vunpack.c.l.b16 %v520
      %v560 = vunpack.c.l.b16 %v521
      %v561 = vunpack.c.l.b16 %v522
      %v562 = vunpack.c.l.b16 %v523
      %v563 = vunpack.c.l.b16 %v524
      %v564 = vunpack.c.l.b16 %v525
      %v565 = vunpack.c.l.b16 %v526
      %v566 = vunpack.c.l.b16 %v527
      %v567 = vpack.c.b16 %v552, %v551
      %v568 = vpack.c.b16 %v554, %v553
      %v569 = vpack.c.b16 %v556, %v555
      %v570 = vpack.c.b16 %v558, %v557
      %v571 = vpack.c.b16 %v560, %v559
      %v572 = vpack.c.b16 %v562, %v561
      %v573 = vpack.c.b16 %v564, %v563
      %v574 = vpack.c.b16 %v566, %v565
      %583 = vmatprep.subr.bf16.mxu0 0
      %584 = vmatpush1.bf16.msra.mxu0 %v574
      %585 = vmatprep.subr.bf16.mxu0 0
      %586 = vmatpush1.bf16.msra.mxu0 %v573
      %587 = vmatprep.subr.bf16.mxu0 0
      %588 = vmatpush1.bf16.msra.mxu0 %v572
      %589 = vmatprep.subr.bf16.mxu0 0
      %590 = vmatpush1.bf16.msra.mxu0 %v571
      %591 = vmatprep.subr.bf16.mxu0 0
      %592 = vmatpush1.bf16.msra.mxu0 %v570
      %593 = vmatprep.subr.bf16.mxu0 0
      %594 = vmatpush1.bf16.msra.mxu0 %v569
      %595 = vmatprep.subr.bf16.mxu0 0
      %596 = vmatpush1.bf16.msra.mxu0 %v568
      %597 = vmatprep.subr.bf16.mxu0 0
      %598 = vmatpush1.bf16.msra.mxu0 %v567
      %599 = vmatprep.subr.bf16.mxu0 0
      %600 = vmatpush2.bf16.msra.mxu0 0
      %601 = vmatprep.subr.bf16.mxu0 0
      %602 = vmatpush2.bf16.msra.mxu0 0
      %603 = vmatprep.subr.bf16.mxu0 0
      %604 = vmatpush2.bf16.msra.mxu0 0
      %605 = vmatprep.subr.bf16.mxu0 0
      %606 = vmatpush2.bf16.msra.mxu0 0
      %607 = vmatprep.subr.bf16.mxu0 0
      %608 = vmatpush2.bf16.msra.mxu0 0
      %609 = vmatprep.subr.bf16.mxu0 0
      %610 = vmatpush2.bf16.msra.mxu0 0
      %611 = vmatprep.subr.bf16.mxu0 0
      %612 = vmatpush2.bf16.msra.mxu0 0
      %613 = vmatprep.subr.bf16.mxu0 0
      %614 = vmatpush2.bf16.msra.mxu0 0
      %615 = vmatprep.mubr.bf16.mxu0 0
      %616 = vmatmul.mubr.bf16.gmra.mxu0 %v511
      %v617 = vpop.f32.mrf.mxu0
      %v618 = vadd.f32 %v533, %v617
      %v619 = vpop.f32.mrf.mxu0
      %v620 = vpop.f32.mrf.mxu0
      %v621 = vpop.f32.mrf.mxu0
      %622 = vdwg.mxu0
      %v623 = vmul.f32 %v618, 0.5
      %v624 = vmul.f32 %v618, 0.70710677
      %v625 = verf.f32.pop %v624
      %v626 = vadd.f32 %v625, 1.0
      %v627 = vmul.f32 %v623, %v626
      %v628 = vpack.c.bf16 %v627, %v627
      %v629 = vld [vmem:[#allocation5] sm:$0xf]
      %v630 = vld [vmem:[#allocation5 + $0x4] sm:$0xf]
      %v631 = vld [vmem:[#allocation5 + $0x8] sm:$0xf]
      %v632 = vld [vmem:[#allocation5 + $0xc] sm:$0xf]
      %v633 = vld [vmem:[#allocation5 + $0x10] sm:$0xf]
      %v634 = vld [vmem:[#allocation5 + $0x14] sm:$0xf]
      %v635 = vld [vmem:[#allocation5 + $0x18] sm:$0xf]
      %v636 = vld [vmem:[#allocation5 + $0x1c] sm:$0xf]
      %v637 = vld [vmem:[#allocation5 + $0x20] sm:$0xf]
      %v638 = vld [vmem:[#allocation5 + $0x24] sm:$0xf]
      %v639 = vld [vmem:[#allocation5 + $0x28] sm:$0xf]
      %v640 = vld [vmem:[#allocation5 + $0x2c] sm:$0xf]
      %v641 = vld [vmem:[#allocation5 + $0x30] sm:$0xf]
      %v642 = vld [vmem:[#allocation5 + $0x34] sm:$0xf]
      %v643 = vld [vmem:[#allocation5 + $0x38] sm:$0xf]
      %v644 = vld [vmem:[#allocation5 + $0x3c] sm:$0xf]
      %v645 = vld [vmem:[%s5] sm:$0x1]
      %v647 = vlaneseq
      %v648 = vshrl.u32 %v647, 7
      %v649 = vsub.s32 0, %v648
      %v650 = vrot.slane %v645, %v649
      %v668 = vunpack.c.l.b16 %v629
      %v669 = vunpack.c.l.b16 %v630
      %v670 = vunpack.c.l.b16 %v631
      %v671 = vunpack.c.l.b16 %v632
      %v672 = vunpack.c.l.b16 %v633
      %v673 = vunpack.c.l.b16 %v634
      %v674 = vunpack.c.l.b16 %v635
      %v675 = vunpack.c.l.b16 %v636
      %v676 = vunpack.c.l.b16 %v637
      %v677 = vunpack.c.l.b16 %v638
      %v678 = vunpack.c.l.b16 %v639
      %v679 = vunpack.c.l.b16 %v640
      %v680 = vunpack.c.l.b16 %v641
      %v681 = vunpack.c.l.b16 %v642
      %v682 = vunpack.c.l.b16 %v643
      %v683 = vunpack.c.l.b16 %v644
      %v684 = vpack.c.b16 %v669, %v668
      %v685 = vpack.c.b16 %v671, %v670
      %v686 = vpack.c.b16 %v673, %v672
      %v687 = vpack.c.b16 %v675, %v674
      %v688 = vpack.c.b16 %v677, %v676
      %v689 = vpack.c.b16 %v679, %v678
      %v690 = vpack.c.b16 %v681, %v680
      %v691 = vpack.c.b16 %v683, %v682
      %700 = vmatprep.subr.bf16.mxu0 0
      %701 = vmatpush1.bf16.msra.mxu0 %v691
      %702 = vmatprep.subr.bf16.mxu0 0
      %703 = vmatpush1.bf16.msra.mxu0 %v690
      %704 = vmatprep.subr.bf16.mxu0 0
      %705 = vmatpush1.bf16.msra.mxu0 %v689
      %706 = vmatprep.subr.bf16.mxu0 0
      %707 = vmatpush1.bf16.msra.mxu0 %v688
      %708 = vmatprep.subr.bf16.mxu0 0
      %709 = vmatpush1.bf16.msra.mxu0 %v687
      %710 = vmatprep.subr.bf16.mxu0 0
      %711 = vmatpush1.bf16.msra.mxu0 %v686
      %712 = vmatprep.subr.bf16.mxu0 0
      %713 = vmatpush1.bf16.msra.mxu0 %v685
      %714 = vmatprep.subr.bf16.mxu0 0
      %715 = vmatpush1.bf16.msra.mxu0 %v684
      %716 = vmatprep.subr.bf16.mxu0 0
      %717 = vmatpush2.bf16.msra.mxu0 0
      %718 = vmatprep.subr.bf16.mxu0 0
      %719 = vmatpush2.bf16.msra.mxu0 0
      %720 = vmatprep.subr.bf16.mxu0 0
      %721 = vmatpush2.bf16.msra.mxu0 0
      %722 = vmatprep.subr.bf16.mxu0 0
      %723 = vmatpush2.bf16.msra.mxu0 0
      %724 = vmatprep.subr.bf16.mxu0 0
      %725 = vmatpush2.bf16.msra.mxu0 0
      %726 = vmatprep.subr.bf16.mxu0 0
      %727 = vmatpush2.bf16.msra.mxu0 0
      %728 = vmatprep.subr.bf16.mxu0 0
      %729 = vmatpush2.bf16.msra.mxu0 0
      %730 = vmatprep.subr.bf16.mxu0 0
      %731 = vmatpush2.bf16.msra.mxu0 0
      %732 = vmatprep.mubr.bf16.mxu0 0
      %733 = vmatmul.mubr.bf16.gmra.mxu0 %v628
      %v734 = vpop.f32.mrf.mxu0
      %v735 = vadd.f32 %v650, %v734
      %v736 = vpop.f32.mrf.mxu0
      %v737 = vpop.f32.mrf.mxu0
      %v738 = vpop.f32.mrf.mxu0
      %739 = vdwg.mxu0
      %740 = vst [vmem:[#allocation8] sm:$0x1] %v735
      %741 = vst [vmem:[#allocation8 + $0x8] sm:$0x2] %v735
    $region53: #{tpu_custom_call.1} parent=1 // pred_fallthru
      _
    // Predicated region
    $region54: #{tpu_custom_call.1} parent=1 // pred_check
      _
    $region55: #{tpu_custom_call.1} parent=1 // pred_check_branch
      %743 = sbr.rel (0) target = $region57
    $region56: #{tpu_custom_call.1} parent=1 // pred_region
      %s745 = ssub.s32 384, 384
      %746 = vsyncadd [#allocation4], %s745
      %s747 = sshll.u32 [#allocation8], 4
      %s748 = int_to_ptr.vmem [resolvable:$true] %s747
      %753 = dma.vmem_to_hbm [thread:$0]  %s748, 384, %s7, [#allocation4], 128, 128, 8
    $region57: #{tpu_custom_call.1} parent=1 // pred_fallthru
      _
    // Predicated region
    $region58: #{tpu_custom_call.1} parent=1 // pred_check
      _
    $region59: #{tpu_custom_call.1} parent=1 // pred_check_branch
      %755 = sbr.rel (0) target = $region61
    $region60: #{tpu_custom_call.1} parent=1 // pred_region
      %756 = dma.done [#allocation4], 384
    $region61: #{tpu_custom_call.1} parent=1 // pred_fallthru
      _
    %757 = vsyncpa [#allocation3], 1
    %758 = vsyncpa [#allocation6], 1
    %759 = vsyncpa [#allocation4], 1

</llo_original>
